<compile_context>
chip_gen: v5e
topology: v5e:2x2
jax: 0.10.0
libtpu: 0.0.40
codegen_flags: <defaults>
</compile_context>

<pallas_src>
import jax
import jax.numpy as jnp
from jax.experimental import pallas as pl
from jax.experimental.pallas import tpu as pltpu


_LANE = 128
_SMALL_BYTES = 1 << 20                    # <= 1 MiB: one whole-array block
_TARGET_BLOCK_BYTES = 4 * 1024 * 1024     # 2-4 MiB is at HBM roofline on v5e/v6e; ok on v7x
_MIN_GRID = 8                             # >= ~8 blocks: DMA/writeback overlap + megacore balance


def _round_kernel(x_ref, o_ref):
    # torch.round rounds half-to-even; jnp.round matches that semantics.
    o_ref[...] = jnp.round(x_ref[...])


def _round_up(v, m):
    return -(-v // m) * m


def _row_align(itemsize):
    # Sublane tiling requirement per dtype: f32 -> 8, bf16 -> 16, int8/fp8 -> 32.
    return max(8, 32 // max(1, itemsize))


def _pick_width(n):
    # Widest lane-dense slab width that divides the flat length (no padding).
    for w in (16384, 8192, 4096, 2048, 1024, 512, 256, 128):
        if n % w == 0:
            return w
    return None


def _pick_tile_rows(rows, width, itemsize):
    align = _row_align(itemsize)
    if rows <= align:
        return rows                        # single full-height block (== array dim)
    # Rows per block for ~_TARGET_BLOCK_BYTES.
    tr = max(align, (_TARGET_BLOCK_BYTES // (width * itemsize)) // align * align)
    # Cap so the grid has at least ~_MIN_GRID steps (pipelining + core balance).
    cap = max(align, _round_up(pl.cdiv(rows, _MIN_GRID), align))
    return max(align, min(tr, cap))


def _round_pallas_single(x2d):
    # Whole array resident in VMEM as one block: no pipeline prologue/epilogue.
    return pl.pallas_call(
        _round_kernel,
        out_shape=jax.ShapeDtypeStruct(x2d.shape, x2d.dtype),
    )(x2d)


def _round_pallas_tiled(x2d, tile_rows):
    rows, width = x2d.shape
    itemsize = jnp.dtype(x2d.dtype).itemsize
    block_bytes = tile_rows * width * itemsize
    # Double-buffered input + output blocks plus a small fixed pad; stays well
    # inside the default scoped-VMEM budget so this composes with neighbors.
    vmem_limit = int(4 * block_bytes + 2 * 1024 * 1024)
    grid = (pl.cdiv(rows, tile_rows),)
    return pl.pallas_call(
        _round_kernel,
        out_shape=jax.ShapeDtypeStruct((rows, width), x2d.dtype),
        grid_spec=pltpu.PrefetchScalarGridSpec(
            num_scalar_prefetch=0,
            grid=grid,
            in_specs=[pl.BlockSpec((tile_rows, width), lambda i: (i, 0))],
            out_specs=pl.BlockSpec((tile_rows, width), lambda i: (i, 0)),
        ),
        compiler_params=pltpu.CompilerParams(
            dimension_semantics=("parallel",),
            vmem_limit_bytes=vmem_limit,
        ),
        cost_estimate=pl.CostEstimate(
            flops=0,
            transcendentals=0,
            bytes_accessed=2 * rows * width * itemsize,
        ),
    )(x2d)


def _quantize_impl(x):
    orig_shape = x.shape
    n = x.size
    if n == 0:
        return x
    if not jnp.issubdtype(x.dtype, jnp.floating):
        # round() is the identity on integer / bool inputs: skip the kernel.
        return x

    itemsize = jnp.dtype(x.dtype).itemsize

    if n % _LANE == 0:
        if n * itemsize <= _SMALL_BYTES:
            # Small-input fast path: one sublane/lane-dense block.
            x2d = x.reshape(n // _LANE, _LANE)
            return _round_pallas_single(x2d).reshape(orig_shape)
        width = _pick_width(n)
        rows = n // width
        x2d = x.reshape(rows, width)
        tr = _pick_tile_rows(rows, width, itemsize)
        return _round_pallas_tiled(x2d, tr).reshape(orig_shape)

    # Rare fallback: flat length not a multiple of 128.  Stream the lane-aligned
    # prefix and round the (<128-element) tail with a tiny single-block kernel.
    xf = x.reshape(-1)
    prefix_len = (n // _LANE) * _LANE
    tail = _round_pallas_single(xf[prefix_len:].reshape(1, n - prefix_len))
    if prefix_len == 0:
        return tail.reshape(orig_shape)
    xp = xf[:prefix_len]
    if prefix_len * itemsize <= _SMALL_BYTES:
        yp = _round_pallas_single(xp.reshape(prefix_len // _LANE, _LANE))
    else:
        width = _pick_width(prefix_len)
        rows = prefix_len // width
        tr = _pick_tile_rows(rows, width, itemsize)
        yp = _round_pallas_tiled(xp.reshape(rows, width), tr)
    yf = jnp.concatenate([yp.reshape(-1), tail.reshape(-1)])
    return yf.reshape(orig_shape)


@jax.custom_vjp
def differentiable_quantize(x):
    """Forward: elementwise round (half-to-even). Backward: straight-through."""
    return _quantize_impl(x)


def _dq_fwd(x):
    return _quantize_impl(x), None


def _dq_bwd(_, g):
    # Straight-through estimator: pass the gradient through unchanged.
    return (g,)


differentiable_quantize.defvjp(_dq_fwd, _dq_bwd)


class DifferentiableQuantize:
    """JAX/Pallas equivalent of the PyTorch DifferentiableQuantize module."""

    def __call__(self, x):
        return differentiable_quantize(x)


if __name__ == "__main__":
    key = jax.random.PRNGKey(0)
    k_small, k_big, k_odd = jax.random.split(key, 3)

    mod = DifferentiableQuantize()

    # Small NCHW input consistent with JPEG-style usage: [B=2, C=4, H=16, W=16].
    x_small = jax.random.normal(k_small, (2, 4, 16, 16), dtype=jnp.float32) * 10.0
    y_small = jax.block_until_ready(mod(x_small))
    assert y_small.shape == x_small.shape and y_small.dtype == x_small.dtype
    assert jnp.allclose(y_small, jnp.round(x_small)), "small-path mismatch vs reference"

    # Straight-through gradient check.
    g = jax.block_until_ready(
        jax.grad(lambda v: jnp.sum(differentiable_quantize(v)))(x_small)
    )
    assert jnp.allclose(g, jnp.ones_like(x_small)), "STE gradient mismatch"

    # Tiled (large-input) path: 2 MiB f32, lane-dense, multi-block parallel grid.
    x_big = jax.random.normal(k_big, (4, 8, 128, 128), dtype=jnp.float32) * 10.0
    y_big = jax.block_until_ready(mod(x_big))
    assert jnp.allclose(y_big, jnp.round(x_big)), "tiled-path mismatch vs reference"

    # Non-128-divisible flat length: aligned-prefix + tiny-tail path.
    x_odd = jax.random.normal(k_odd, (2, 67), dtype=jnp.float32) * 10.0
    y_odd = jax.block_until_ready(mod(x_odd))
    assert jnp.allclose(y_odd, jnp.round(x_odd)), "tail-path mismatch vs reference"

    print("KERNEL_OK")
</pallas_src>

<mosaic_0001>
module attributes {stable_mosaic.version = 11 : i64} {
  func.func @_round_kernel(%arg0: memref<16x128xf32, #tpu.memory_space<vmem>>, %arg1: memref<16x128xf32, #tpu.memory_space<vmem>>) attributes {dimension_semantics = [], scalar_prefetch = 0 : i64, scratch_operands = 0 : i64, tpu.core_type = #tpu.core_type<tc>} {
    %c0 = arith.constant 0 : index
    %c0_0 = arith.constant 0 : index
    %0 = vector.load %arg0[%c0, %c0_0] : memref<16x128xf32, #tpu.memory_space<vmem>>, vector<16x128xf32>
    %1 = math.roundeven %0 : vector<16x128xf32>
    %c0_1 = arith.constant 0 : index
    %c0_2 = arith.constant 0 : index
    %2 = vector.load %arg1[%c0_1, %c0_2] : memref<16x128xf32, #tpu.memory_space<vmem>>, vector<16x128xf32>
    tpu.vector_store %arg1[%c0_1, %c0_2], %1 {strides = array<i32>} : memref<16x128xf32, #tpu.memory_space<vmem>>, vector<16x128xf32>,
    return
  }
}

</mosaic_0001>

<llo_original>
// kernel: tpu_custom_call.1
$region0: #{tpu_custom_call.1}
  #allocation0 [shape = 'u32[]', space=smem, size = 0x4, offset = 0x4, fixed_abs, tag = 'smem constant byte address 0x4 - core index']
  #allocation1 [shape = 'u32[72,128]{1,0:T(1,128)}', space=vmem, size = 0x9000, scoped, tag = 'internal scratch']
  %s0 = inlined_call_operand.hbm [shape: f32[16,128], index: 0, kind: input, shape index: {}]
  %s1 = inlined_call_operand.hbm [shape: f32[16,128], index: 1, kind: output, shape index: {}]
  %s2 = sld [smem:[#allocation0]]
  $region18: #{tpu_custom_call.1} parent=0
    _
  %s4 = ssub.s32 1, %s2
  %s5 = scalar_select 0, %s4, %s2
  $region1: #{tpu_custom_call.1} parent=0
    #allocation2 [shape = 'u8[8192]{0}', space=vmem, size = 0x2000, scoped, tag = 'input window, operand 0, single buffered']
    #allocation3 [shape = 's32[1]{0}', space=sflag, size = 0x4, scoped, tag = 'scoped memory for tpu_custom_call.1']
    #allocation4 [shape = 's32[1]{0}', space=sflag, size = 0x4, scoped, tag = 'scoped memory for tpu_custom_call.1']
    #allocation5 [shape = 'u8[8192]{0}', space=vmem, size = 0x2000, scoped, tag = 'output window, operand 0, single buffered']
    %6 = vsyncpa [#allocation3], 0
    %7 = vsyncpa [#allocation4], 0
    // Predicated region
    $region2: #{tpu_custom_call.1} parent=1 // pred_check
      _
    $region3: #{tpu_custom_call.1} parent=1 // pred_check_branch
      %9 = sbr.rel (0) target = $region5
    $region4: #{tpu_custom_call.1} parent=1 // pred_region
      %11 = vsyncadd [#allocation3], 0
      %s12 = sshll.u32 %s0, 4
      %s13 = int_to_ptr.hbm [resolvable:$true] %s12
      %s14 = sshll.u32 [#allocation2], 4
      %s15 = int_to_ptr.vmem [resolvable:$true] %s14
      %20 = dma.hbm_to_vmem [thread:$0]  %s13, 256, %s15, [#allocation3], 128, 128, 8
    $region5: #{tpu_custom_call.1} parent=1 // pred_fallthru
      _
    // Predicated region
    $region6: #{tpu_custom_call.1} parent=1 // pred_check
      _
    $region7: #{tpu_custom_call.1} parent=1 // pred_check_branch
      %22 = sbr.rel (0) target = $region9
    $region8: #{tpu_custom_call.1} parent=1 // pred_region
      %24 = dma.done [#allocation3], 256
    $region9: #{tpu_custom_call.1} parent=1 // pred_fallthru
      _
    %v25 = vld [vmem:[#allocation2] sm:$0xff]
    %v26 = vld [vmem:[#allocation2 + $0x8] sm:$0xff]
    %v27 = vround.ne.pseudo %v25
    %v28 = vround.ne.pseudo %v26
    %29 = vst [vmem:[#allocation5] sm:$0xff] %v27
    %30 = vst [vmem:[#allocation5 + $0x8] sm:$0xff] %v28
    // Predicated region
    $region10: #{tpu_custom_call.1} parent=1 // pred_check
      _
    $region11: #{tpu_custom_call.1} parent=1 // pred_check_branch
      %32 = sbr.rel (0) target = $region13
    $region12: #{tpu_custom_call.1} parent=1 // pred_region
      %34 = vsyncadd [#allocation4], 0
      %s35 = sshll.u32 [#allocation5], 4
      %s36 = int_to_ptr.vmem [resolvable:$true] %s35
      %s37 = sshll.u32 %s1, 4
      %s38 = int_to_ptr.hbm [resolvable:$true] %s37
      %43 = dma.vmem_to_hbm [thread:$0]  %s36, 256, %s38, [#allocation4], 128, 128, 8
    $region13: #{tpu_custom_call.1} parent=1 // pred_fallthru
      _
    // Predicated region
    $region14: #{tpu_custom_call.1} parent=1 // pred_check
      _
    $region15: #{tpu_custom_call.1} parent=1 // pred_check_branch
      %45 = sbr.rel (0) target = $region17
    $region16: #{tpu_custom_call.1} parent=1 // pred_region
      %47 = dma.done [#allocation4], 256
    $region17: #{tpu_custom_call.1} parent=1 // pred_fallthru
      _
    %48 = vsyncpa [#allocation3], 1
    %49 = vsyncpa [#allocation4], 1

</llo_original>
